<compile_context>
chip_gen: v7x
topology: tpu7x:2x2x1
jax: 0.10.0
libtpu: 0.0.40
codegen_flags: <defaults>
</compile_context>

<pallas_src>
import functools

import jax
import jax.numpy as jnp
from jax import lax
from jax.experimental import pallas as pl
from jax.experimental.pallas import tpu as pltpu


_NEG_INF = -1e30  # finite mask value: avoids inf-inf NaNs in the online softmax


# --------------------------------------------------------------------------- #
# Pass 1: fused QKV projection (one wide matmul per token tile)
# --------------------------------------------------------------------------- #
def _qkv_proj_kernel(x_ref, wqkv_ref, q_ref, k_ref, v_ref, *, emb):
    x = x_ref[0]                                                  # (block, C)
    qkv = jnp.dot(x, wqkv_ref[...], preferred_element_type=jnp.float32)
    q_ref[0] = qkv[:, 0 * emb:1 * emb].astype(q_ref.dtype)
    k_ref[0] = qkv[:, 1 * emb:2 * emb].astype(k_ref.dtype)
    v_ref[0] = qkv[:, 2 * emb:3 * emb].astype(v_ref.dtype)


# --------------------------------------------------------------------------- #
# Pass 2: flash-style causal attention + output projection
# --------------------------------------------------------------------------- #
def _flash_kernel(q_ref, k_ref, v_ref, wp_ref, b_ref, o_ref,
                  m_scr, l_scr, acc_scr, cat_scr,
                  *, num_heads, head_size, block):
    NH, H = num_heads, head_size
    qi = pl.program_id(1)
    ki = pl.program_id(2)
    dt = q_ref.dtype

    @pl.when(ki == 0)
    def _init():
        m_scr[...] = jnp.full(m_scr.shape, _NEG_INF, dtype=m_scr.dtype)
        l_scr[...] = jnp.zeros(l_scr.shape, dtype=l_scr.dtype)
        acc_scr[...] = jnp.zeros(acc_scr.shape, dtype=acc_scr.dtype)

    def _attend(masked):
        q_all = q_ref[0]                                          # (block, C)
        k_all = k_ref[0]
        v_all = v_ref[0]
        if masked:
            row = qi * block + lax.broadcasted_iota(jnp.int32, (block, block), 0)
            col = ki * block + lax.broadcasted_iota(jnp.int32, (block, block), 1)
            keep = col <= row
        for h in range(NH):
            hs = slice(h * H, (h + 1) * H)
            # q @ k^T per head: contraction over the head dim (no explicit k.T).
            s = lax.dot_general(q_all[:, hs], k_all[:, hs],
                                (((1,), (1,)), ((), ())),
                                preferred_element_type=jnp.float32)  # (bq, bk)
            if masked:
                s = jnp.where(keep, s, _NEG_INF)
            m_prev = m_scr[:, h:h + 1]                            # (bq, 1)
            m_new = jnp.maximum(m_prev, jnp.max(s, axis=-1, keepdims=True))
            alpha = jnp.exp(m_prev - m_new)
            p = jnp.exp(s - m_new)
            l_scr[:, h:h + 1] = alpha * l_scr[:, h:h + 1] + jnp.sum(
                p, axis=-1, keepdims=True)
            acc_scr[:, hs] = alpha * acc_scr[:, hs] + jnp.dot(
                p.astype(dt), v_all[:, hs], preferred_element_type=jnp.float32)
            m_scr[:, h:h + 1] = m_new

    # Interior tiles: strictly below the diagonal -> no mask needed.
    @pl.when(ki < qi)
    def _interior():
        _attend(masked=False)

    # Diagonal tile: masked, and it is the last contributing tile for this q
    # block, so finalize (normalize + concat + output projection) right here.
    @pl.when(ki == qi)
    def _diag_and_finalize():
        _attend(masked=True)
        inv_l = pl.reciprocal(l_scr[...], approx=False)           # (block, NH)
        for h in range(NH):
            hs = slice(h * H, (h + 1) * H)
            cat_scr[:, hs] = (acc_scr[:, hs] * inv_l[:, h:h + 1]).astype(dt)
        out = jnp.dot(cat_scr[...], wp_ref[...],
                      preferred_element_type=jnp.float32)
        out = out + b_ref[...].astype(jnp.float32)                # (1,C) bcast
        o_ref[0] = out.astype(o_ref.dtype)
    # Tiles with ki > qi are entirely in the future: no compute, and their kv
    # DMA is clamped away by the index_map.


# --------------------------------------------------------------------------- #
# Host-side helpers
# --------------------------------------------------------------------------- #
def _choose_block(T):
    if T <= 256:
        return T                      # single full tile (always legal)
    for b in (256, 128):              # keep score tiles lane-dense (>=128)
        if T % b == 0:
            return b
    # TODO(synk): pad/mask ragged T instead of falling back to one big tile.
    return T


def _vmem_limit_bytes():
    # Generation-aware scoped-VMEM limit: ~100 MiB on v5e/v6e (128 MiB physical)
    # and ~48 MiB on v7x (64 MiB physical per TensorCore).
    try:
        cap = pltpu.get_tpu_info().vmem_capacity_bytes
    except Exception:
        cap = 64 * 1024 * 1024        # conservative fallback (v7x-sized)
    return int(min(max(cap - 16 * 1024 * 1024, 32 * 1024 * 1024),
                   100 * 1024 * 1024))


def multi_head_attention3(x, wq, wk, wv, wp_t, bias, *, block=None):
    """x: (B,T,C); wq/wk/wv: (NH,C,H) per-head weights (pre-transposed, x @ W);
    wp_t: (C,C) transposed projection weight; bias: (C,). Returns (B,T,C)."""
    B, T, C = x.shape
    NH, C2, H = wq.shape
    assert C2 == C and NH * H == C, "head dims must tile the embedding dim"

    if block is None:
        block = _choose_block(T)
    assert T % block == 0, "sequence length must be divisible by the block size"

    # Per-head (NH, C, H) -> fused lane-dense (C, C); softmax scale folded in Wq.
    scale = H ** (-0.5)

    def fuse(w):
        return jnp.transpose(w, (1, 0, 2)).reshape(C, NH * H)

    wqkv = jnp.concatenate([fuse(wq) * scale, fuse(wk), fuse(wv)], axis=1)
    bias2d = bias.reshape(1, C)

    vmem_limit = _vmem_limit_bytes()
    n_t = T // block

    # ---- Pass 1: Q/K/V projection (computed once, outside the kv loop) ----
    q, k, v = pl.pallas_call(
        functools.partial(_qkv_proj_kernel, emb=C),
        out_shape=(jax.ShapeDtypeStruct((B, T, C), x.dtype),
                   jax.ShapeDtypeStruct((B, T, C), x.dtype),
                   jax.ShapeDtypeStruct((B, T, C), x.dtype)),
        grid_spec=pltpu.PrefetchScalarGridSpec(
            num_scalar_prefetch=0,
            grid=(B, n_t),
            in_specs=[
                pl.BlockSpec((1, block, C), lambda b, t: (b, t, 0)),   # x
                pl.BlockSpec((C, 3 * C), lambda b, t: (0, 0)),         # [Wq|Wk|Wv]
            ],
            out_specs=[
                pl.BlockSpec((1, block, C), lambda b, t: (b, t, 0)),
                pl.BlockSpec((1, block, C), lambda b, t: (b, t, 0)),
                pl.BlockSpec((1, block, C), lambda b, t: (b, t, 0)),
            ],
        ),
        compiler_params=pltpu.CompilerParams(
            dimension_semantics=("parallel", "parallel"),
            vmem_limit_bytes=vmem_limit),
    )(x, wqkv)

    # ---- Pass 2: flash attention over (q_tile, kv_tile) + output projection ----
    kernel = functools.partial(_flash_kernel, num_heads=NH, head_size=H,
                               block=block)

    grid_spec = pltpu.PrefetchScalarGridSpec(
        num_scalar_prefetch=0,
        grid=(B, n_t, n_t),
        in_specs=[
            pl.BlockSpec((1, block, C), lambda b, qi, ki: (b, qi, 0)),   # Q rows
            # Clamp so causally-skipped kv tiles (ki > qi) don't trigger a DMA.
            pl.BlockSpec((1, block, C),
                         lambda b, qi, ki: (b, jnp.minimum(ki, qi), 0)),  # K rows
            pl.BlockSpec((1, block, C),
                         lambda b, qi, ki: (b, jnp.minimum(ki, qi), 0)),  # V rows
            pl.BlockSpec((C, C), lambda b, qi, ki: (0, 0)),               # Wp^T
            pl.BlockSpec((1, C), lambda b, qi, ki: (0, 0)),               # bias
        ],
        out_specs=pl.BlockSpec((1, block, C), lambda b, qi, ki: (b, qi, 0)),
        scratch_shapes=[
            pltpu.VMEM((block, NH), jnp.float32),   # running row max per head
            pltpu.VMEM((block, NH), jnp.float32),   # running denom per head
            pltpu.VMEM((block, C), jnp.float32),    # lane-dense accumulator
            pltpu.VMEM((block, C), x.dtype),        # normalized concat (pre-cast)
        ],
    )

    return pl.pallas_call(
        kernel,
        out_shape=jax.ShapeDtypeStruct((B, T, C), x.dtype),
        grid_spec=grid_spec,
        compiler_params=pltpu.CompilerParams(
            dimension_semantics=("parallel", "parallel", "arbitrary"),
            vmem_limit_bytes=vmem_limit),
    )(q, k, v, wp_t, bias2d)


# --------------------------------------------------------------------------- #
# Pure-JAX reference (replicates the PyTorch forward; dropout = identity)
# --------------------------------------------------------------------------- #
def reference_mha(x, wq, wk, wv, wp_t, bias):
    B, T, C = x.shape
    NH, _, H = wq.shape
    scale = H ** (-0.5)
    mask = jnp.tril(jnp.ones((T, T), dtype=bool))

    outs = []
    for h in range(NH):
        q = x @ wq[h]
        k = x @ wk[h]
        v = x @ wv[h]
        att = (q @ jnp.swapaxes(k, -2, -1)) * scale
        att = jnp.where(mask[None], att, -jnp.inf)
        att = jax.nn.softmax(att, axis=-1)
        outs.append(att @ v)
    concat = jnp.concatenate(outs, axis=-1)
    return concat @ wp_t + bias[None, None, :]


if __name__ == "__main__":
    B, T, C = 2, 16, 32
    NH = 4
    H = C // NH

    key = jax.random.PRNGKey(0)
    kx, kq, kk, kv, kp, kb = jax.random.split(key, 6)

    x = jax.random.normal(kx, (B, T, C), dtype=jnp.float32)

    # Deterministic PyTorch-style uniform(-1/sqrt(fan_in), 1/sqrt(fan_in)) init.
    lim = 1.0 / (C ** 0.5)
    wq = jax.random.uniform(kq, (NH, C, H), minval=-lim, maxval=lim, dtype=jnp.float32)
    wk = jax.random.uniform(kk, (NH, C, H), minval=-lim, maxval=lim, dtype=jnp.float32)
    wv = jax.random.uniform(kv, (NH, C, H), minval=-lim, maxval=lim, dtype=jnp.float32)
    wp_t = jax.random.uniform(kp, (C, C), minval=-lim, maxval=lim, dtype=jnp.float32)
    bias = jax.random.uniform(kb, (C,), minval=-lim, maxval=lim, dtype=jnp.float32)

    ref = reference_mha(x, wq, wk, wv, wp_t, bias)

    # Multi-tile path: exercises flash tiling, causal skip, clamped kv DMA,
    # masked-diagonal vs unmasked-interior branches.
    out_tiled = jax.block_until_ready(
        multi_head_attention3(x, wq, wk, wv, wp_t, bias, block=8))
    assert out_tiled.shape == (B, T, C)
    assert jnp.allclose(out_tiled, ref, atol=1e-3, rtol=1e-3), "tiled mismatch"

    # Default (single-tile) path.
    out_full = jax.block_until_ready(
        multi_head_attention3(x, wq, wk, wv, wp_t, bias))
    assert jnp.allclose(out_full, ref, atol=1e-3, rtol=1e-3), "full mismatch"

    print("KERNEL_OK")
</pallas_src>

<mosaic_0001>
module attributes {stable_mosaic.version = 11 : i64} {
  func.func @_qkv_proj_kernel(%arg0: i32, %arg1: i32, %arg2: memref<1x8x32xf32, #tpu.memory_space<vmem>>, %arg3: memref<32x96xf32, #tpu.memory_space<vmem>>, %arg4: memref<1x8x32xf32, #tpu.memory_space<vmem>>, %arg5: memref<1x8x32xf32, #tpu.memory_space<vmem>>, %arg6: memref<1x8x32xf32, #tpu.memory_space<vmem>>) attributes {dimension_semantics = [#tpu.dimension_semantics<parallel>, #tpu.dimension_semantics<parallel>], iteration_bounds = array<i64: 2, 2>, scalar_prefetch = 0 : i64, scratch_operands = 0 : i64, tpu.core_type = #tpu.core_type<tc>, window_params = [{transform_indices = @transform_0, window_bounds = array<i64: 1, 8, 32>}, {pipeline_mode = #tpu.pipeline_mode<synchronous>, transform_indices = @transform_1, window_bounds = array<i64: 32, 96>}, {transform_indices = @transform_2, window_bounds = array<i64: 1, 8, 32>}, {transform_indices = @transform_3, window_bounds = array<i64: 1, 8, 32>}, {transform_indices = @transform_4, window_bounds = array<i64: 1, 8, 32>}]} {
    %c0 = arith.constant 0 : index
    %c0_0 = arith.constant 0 : index
    %c0_1 = arith.constant 0 : index
    %0 = vector.load %arg2[%c0, %c0_0, %c0_1] : memref<1x8x32xf32, #tpu.memory_space<vmem>>, vector<1x8x32xf32>
    %1 = vector.shape_cast %0 : vector<1x8x32xf32> to vector<8x32xf32>
    %c0_2 = arith.constant 0 : index
    %c0_3 = arith.constant 0 : index
    %2 = vector.load %arg3[%c0_2, %c0_3] : memref<32x96xf32, #tpu.memory_space<vmem>>, vector<32x96xf32>
    %cst = arith.constant dense<0.000000e+00> : vector<8x96xf32>
    %3 = tpu.matmul %1, %2, %cst {dimension_numbers = #tpu.dot_dimension_numbers<[1], [0], [0], [1], [0, 0, 1, 1], [], []>} : vector<8x32xf32>, vector<32x96xf32>, vector<8x96xf32> -> vector<8x96xf32>
    %4 = vector.extract_strided_slice %3 {offsets = [0, 0], sizes = [8, 32], strides = [1, 1]} : vector<8x96xf32> to vector<8x32xf32>
    %c0_4 = arith.constant 0 : index
    %c0_5 = arith.constant 0 : index
    %c0_6 = arith.constant 0 : index
    %5 = vector.load %arg4[%c0_4, %c0_5, %c0_6] : memref<1x8x32xf32, #tpu.memory_space<vmem>>, vector<1x8x32xf32>
    %6 = vector.shape_cast %5 : vector<1x8x32xf32> to vector<8x32xf32>
    %7 = vector.shape_cast %4 : vector<8x32xf32> to vector<1x8x32xf32>
    tpu.vector_store %arg4[%c0_4, %c0_5, %c0_6], %7 {strides = array<i32>} : memref<1x8x32xf32, #tpu.memory_space<vmem>>, vector<1x8x32xf32>,
    %8 = vector.extract_strided_slice %3 {offsets = [0, 32], sizes = [8, 32], strides = [1, 1]} : vector<8x96xf32> to vector<8x32xf32>
    %c0_7 = arith.constant 0 : index
    %c0_8 = arith.constant 0 : index
    %c0_9 = arith.constant 0 : index
    %9 = vector.load %arg5[%c0_7, %c0_8, %c0_9] : memref<1x8x32xf32, #tpu.memory_space<vmem>>, vector<1x8x32xf32>
    %10 = vector.shape_cast %9 : vector<1x8x32xf32> to vector<8x32xf32>
    %11 = vector.shape_cast %8 : vector<8x32xf32> to vector<1x8x32xf32>
    tpu.vector_store %arg5[%c0_7, %c0_8, %c0_9], %11 {strides = array<i32>} : memref<1x8x32xf32, #tpu.memory_space<vmem>>, vector<1x8x32xf32>,
    %12 = vector.extract_strided_slice %3 {offsets = [0, 64], sizes = [8, 32], strides = [1, 1]} : vector<8x96xf32> to vector<8x32xf32>
    %c0_10 = arith.constant 0 : index
    %c0_11 = arith.constant 0 : index
    %c0_12 = arith.constant 0 : index
    %13 = vector.load %arg6[%c0_10, %c0_11, %c0_12] : memref<1x8x32xf32, #tpu.memory_space<vmem>>, vector<1x8x32xf32>
    %14 = vector.shape_cast %13 : vector<1x8x32xf32> to vector<8x32xf32>
    %15 = vector.shape_cast %12 : vector<8x32xf32> to vector<1x8x32xf32>
    tpu.vector_store %arg6[%c0_10, %c0_11, %c0_12], %15 {strides = array<i32>} : memref<1x8x32xf32, #tpu.memory_space<vmem>>, vector<1x8x32xf32>,
    return
  }
  func.func @transform_0(%arg0: i32, %arg1: i32) -> (i32, i32, i32) {
    %c0_i32 = arith.constant 0 : i32
    %c0_i32_0 = arith.constant 0 : i32
    return %arg0, %arg1, %c0_i32 : i32, i32, i32
  }
  func.func @transform_1(%arg0: i32, %arg1: i32) -> (i32, i32) {
    %c0_i32 = arith.constant 0 : i32
    %c0_i32_0 = arith.constant 0 : i32
    %c0_i32_1 = arith.constant 0 : i32
    return %c0_i32, %c0_i32_0 : i32, i32
  }
  func.func @transform_2(%arg0: i32, %arg1: i32) -> (i32, i32, i32) {
    %c0_i32 = arith.constant 0 : i32
    %c0_i32_0 = arith.constant 0 : i32
    return %arg0, %arg1, %c0_i32 : i32, i32, i32
  }
  func.func @transform_3(%arg0: i32, %arg1: i32) -> (i32, i32, i32) {
    %c0_i32 = arith.constant 0 : i32
    %c0_i32_0 = arith.constant 0 : i32
    return %arg0, %arg1, %c0_i32 : i32, i32, i32
  }
  func.func @transform_4(%arg0: i32, %arg1: i32) -> (i32, i32, i32) {
    %c0_i32 = arith.constant 0 : i32
    %c0_i32_0 = arith.constant 0 : i32
    return %arg0, %arg1, %c0_i32 : i32, i32, i32
  }
}

</mosaic_0001>

<llo_original>
// kernel: tpu_custom_call.1
$region0: #{tpu_custom_call.1}
  #allocation0 [shape = 'u32[]', space=smem, size = 0x4, offset = 0x4, fixed_abs, tag = 'smem constant byte address 0x4 - core index']
  #allocation1 [shape = 'u32[144,128]{1,0:T(1,128)}', space=vmem, size = 0x12000, scoped, tag = 'internal scratch']
  %s0 = inlined_call_operand.hbm [shape: f32[2,16,32], index: 0, kind: input, shape index: {}]
  %s1 = inlined_call_operand.hbm [shape: f32[32,96], index: 1, kind: input, shape index: {}]
  %s2 = inlined_call_operand.hbm [shape: f32[2,16,32], index: 2, kind: output, shape index: {0}]
  %s3 = inlined_call_operand.hbm [shape: f32[2,16,32], index: 3, kind: output, shape index: {1}]
  %s4 = inlined_call_operand.hbm [shape: f32[2,16,32], index: 4, kind: output, shape index: {2}]
  %5 = xla_tuple %s2, %s3, %s4
  %s6 = sld [smem:[#allocation0]]
  $region65: #{tpu_custom_call.1} parent=0
    _
  %s8 = ssub.s32 1, %s6
  %s9 = scalar_select 0, %s8, %s6
  $region1: #{tpu_custom_call.1} parent=0
    #allocation2 [shape = 'u8[8192]{0}', space=vmem, size = 0x2000, scoped, tag = 'input window, operand 0']
    #allocation3 [shape = 's32[2]{0}', space=sflag, size = 0x8, scoped, tag = 'scoped memory for tpu_custom_call.1']
    #allocation4 [shape = 's32[2]{0}', space=sflag, size = 0x8, scoped, tag = 'scoped memory for tpu_custom_call.1']
    #allocation5 [shape = 'u8[16384]{0}', space=vmem, size = 0x4000, scoped, tag = 'input window, operand 1, single buffered']
    #allocation6 [shape = 's32[1]{0}', space=sflag, size = 0x4, scoped, tag = 'scoped memory for tpu_custom_call.1']
    #allocation7 [shape = 'u8[8192]{0}', space=vmem, size = 0x2000, scoped, tag = 'output window, operand 0']
    #allocation8 [shape = 'u8[8192]{0}', space=vmem, size = 0x2000, scoped, tag = 'output window, operand 1']
    #allocation9 [shape = 's32[2]{0}', space=sflag, size = 0x8, scoped, tag = 'scoped memory for tpu_custom_call.1']
    #allocation10 [shape = 'u8[8192]{0}', space=vmem, size = 0x2000, scoped, tag = 'output window, operand 2']
    %10 = vsyncpa [#allocation3], 0
    %s11 = scalar_lea.sflag [#allocation3], 1
    %12 = vsyncpa %s11, 0
    %13 = vsyncpa [#allocation6], 0
    %14 = vsyncpa [#allocation4], 0
    %s15 = scalar_lea.sflag [#allocation4], 1
    %16 = vsyncpa %s15, 0
    %17 = vsyncpa [#allocation9], 0
    %s18 = scalar_lea.sflag [#allocation9], 1
    %19 = vsyncpa %s18, 0
    loop: start=0, step=1, limit=6
    $region2: #{tpu_custom_call.1} parent=1 // loop_pre_header
      _
    $region3: #{tpu_custom_call.1} parent=1 // loop_header
      %s21 = sphi 0, %s25
      %p22 = scmp.ge.s32.totalorder %s21, 6
      %s28 = sphi 0, %s40
      %s29 = sphi 0, %s36
      %s30 = sphi 0, %s28
      %s31 = sphi 0, %s29
      %s32 = sphi 0, %s30
      %s33 = sphi 0, %s31
      %s45 = sphi 0, %s47
      %s48 = sphi 0, %s45
      %s49 = sphi 0, %s48
      %s65 = sphi 0, %s49
      %s69 = sphi 0, %s69
      %s71 = sphi 0, %s69
      %s72 = sphi 0, %s71
      %s86 = sphi 0, %s72
      %s94 = sphi 0, %s96
      %s97 = sphi 0, %s94
      %s98 = sphi 0, %s97
      %s114 = sphi 0, %s98
      %s122 = sphi 0, %s124
      %s125 = sphi 0, %s122
      %s126 = sphi 0, %s125
      %s142 = sphi 0, %s126
      %s150 = sphi 0, %s152
      %s153 = sphi 0, %s150
      %s154 = sphi 0, %s153
      %s170 = sphi 0, %s154
    $region4: #{tpu_custom_call.1} parent=1 // loop_header_branch
      %24 = sbr.rel (%p22) target = $region8
    $region5: #{tpu_custom_call.1} parent=1 // loop_body
      %s26 = ssub.s32 %s21, 1
      %s27 = ssub.s32 %s21, 2
      %s34 = sadd.s32 1, %s29
      %p35 = scmp.ge.s32.totalorder %s34, 2
      %s36 = scalar_select %p35, 0, %s34
      %s37 = sadd.s32 1, %s28
      %s38 = scalar_select %p35, %s37, %s28
      %p39 = scmp.ge.s32.totalorder %s38, 2
      %s40 = scalar_select %p39, 0, %s38
      %s41 = ssub.s32 %s28, %s40
      %s42 = ssub.s32 %s29, %s36
      %s43 = sor.u32 %s41, %s42
      %p44 = scmp.eq.s32.totalorder %s43, 0
      %s46 = sadd.s32 %s45, 1
      %s47 = scalar_select %p44, %s45, %s46
      %p50 = pneg %p44
      %p51 = scmp.eq.s32.totalorder %s21, 3
      %p52 = por %p50, %p51
      %p53 = scmp.ne.s32.totalorder %s45, %s48
      %p54 = scmp.eq.s32.totalorder %s21, 0
      %p55 = por %p53, %p54
      %p56 = scmp.ne.s32.totalorder %s45, %s48
      %p57 = scmp.eq.s32.totalorder %s26, 3
      %p58 = por %p56, %p57
      %p59 = scmp.ne.s32.totalorder %s48, %s49
      %p60 = scmp.eq.s32.totalorder %s26, 0
      %p61 = por %p59, %p60
      %p62 = scmp.ne.s32.totalorder %s48, %s49
      %p63 = scmp.eq.s32.totalorder %s27, 3
      %p64 = por %p62, %p63
      %p66 = scmp.ne.s32.totalorder %s49, %s65
      %p67 = scmp.eq.s32.totalorder %s27, 0
      %p68 = por %p66, %p67
      %s70 = sadd.s32 %s69, 1
      %p73 = scmp.eq.s32.totalorder %s21, 3
      %p74 = scmp.ne.s32.totalorder %s69, %s71
      %p75 = scmp.eq.s32.totalorder %s21, 0
      %p76 = por %p74, %p75
      %p77 = scmp.ne.s32.totalorder %s69, %s71
      %p78 = scmp.eq.s32.totalorder %s26, 3
      %p79 = por %p77, %p78
      %p80 = scmp.ne.s32.totalorder %s71, %s72
      %p81 = scmp.eq.s32.totalorder %s26, 0
      %p82 = por %p80, %p81
      %p83 = scmp.ne.s32.totalorder %s71, %s72
      %p84 = scmp.eq.s32.totalorder %s27, 3
      %p85 = por %p83, %p84
      %p87 = scmp.ne.s32.totalorder %s72, %s86
      %p88 = scmp.eq.s32.totalorder %s27, 0
      %p89 = por %p87, %p88
      %s90 = ssub.s32 %s28, %s40
      %s91 = ssub.s32 %s29, %s36
      %s92 = sor.u32 %s90, %s91
      %p93 = scmp.eq.s32.totalorder %s92, 0
      %s95 = sadd.s32 %s94, 1
      %s96 = scalar_select %p93, %s94, %s95
      %p99 = pneg %p93
      %p100 = scmp.eq.s32.totalorder %s21, 3
      %p101 = por %p99, %p100
      %p102 = scmp.ne.s32.totalorder %s94, %s97
      %p103 = scmp.eq.s32.totalorder %s21, 0
      %p104 = por %p102, %p103
      %p105 = scmp.ne.s32.totalorder %s94, %s97
      %p106 = scmp.eq.s32.totalorder %s26, 3
      %p107 = por %p105, %p106
      %p108 = scmp.ne.s32.totalorder %s97, %s98
      %p109 = scmp.eq.s32.totalorder %s26, 0
      %p110 = por %p108, %p109
      %p111 = scmp.ne.s32.totalorder %s97, %s98
      %p112 = scmp.eq.s32.totalorder %s27, 3
      %p113 = por %p111, %p112
      %p115 = scmp.ne.s32.totalorder %s98, %s114
      %p116 = scmp.eq.s32.totalorder %s27, 0
      %p117 = por %p115, %p116
      %s118 = ssub.s32 %s28, %s40
      %s119 = ssub.s32 %s29, %s36
      %s120 = sor.u32 %s118, %s119
      %p121 = scmp.eq.s32.totalorder %s120, 0
      %s123 = sadd.s32 %s122, 1
      %s124 = scalar_select %p121, %s122, %s123
      %p127 = pneg %p121
      %p128 = scmp.eq.s32.totalorder %s21, 3
      %p129 = por %p127, %p128
      %p130 = scmp.ne.s32.totalorder %s122, %s125
      %p131 = scmp.eq.s32.totalorder %s21, 0
      %p132 = por %p130, %p131
      %p133 = scmp.ne.s32.totalorder %s122, %s125
      %p134 = scmp.eq.s32.totalorder %s26, 3
      %p135 = por %p133, %p134
      %p136 = scmp.ne.s32.totalorder %s125, %s126
      %p137 = scmp.eq.s32.totalorder %s26, 0
      %p138 = por %p136, %p137
      %p139 = scmp.ne.s32.totalorder %s125, %s126
      %p140 = scmp.eq.s32.totalorder %s27, 3
      %p141 = por %p139, %p140
      %p143 = scmp.ne.s32.totalorder %s126, %s142
      %p144 = scmp.eq.s32.totalorder %s27, 0
      %p145 = por %p143, %p144
      %s146 = ssub.s32 %s28, %s40
      %s147 = ssub.s32 %s29, %s36
      %s148 = sor.u32 %s146, %s147
      %p149 = scmp.eq.s32.totalorder %s148, 0
      %s151 = sadd.s32 %s150, 1
      %s152 = scalar_select %p149, %s150, %s151
      %p155 = pneg %p149
      %p156 = scmp.eq.s32.totalorder %s21, 3
      %p157 = por %p155, %p156
      %p158 = scmp.ne.s32.totalorder %s150, %s153
      %p159 = scmp.eq.s32.totalorder %s21, 0
      %p160 = por %p158, %p159
      %p161 = scmp.ne.s32.totalorder %s150, %s153
      %p162 = scmp.eq.s32.totalorder %s26, 3
      %p163 = por %p161, %p162
      %p164 = scmp.ne.s32.totalorder %s153, %s154
      %p165 = scmp.eq.s32.totalorder %s26, 0
      %p166 = por %p164, %p165
      %p167 = scmp.ne.s32.totalorder %s153, %s154
      %p168 = scmp.eq.s32.totalorder %s27, 3
      %p169 = por %p167, %p168
      %p171 = scmp.ne.s32.totalorder %s154, %s170
      %p172 = scmp.eq.s32.totalorder %s27, 0
      %p173 = por %p171, %p172
      %p174 = scmp.le.s32.totalorder 1, %s21
      %p175 = scmp.lt.s32.totalorder %s21, 5
      %p176 = pnand %p174, %p175
      %p177 = pneg %p176
      // Predicated region
      $region9: #{tpu_custom_call.1} parent=5 // pred_check
        _
      $region10: #{tpu_custom_call.1} parent=5 // pred_check_branch
        %179 = sbr.rel (%p176) target = $region12
      $region11: #{tpu_custom_call.1} parent=5 // pred_region
        %s180 = ssub.s32 %s21, 1
        // Predicated region
        $region13: #{tpu_custom_call.1} parent=11 // pred_check
          %p181 = pneg %p82
        $region14: #{tpu_custom_call.1} parent=11 // pred_check_branch
          %183 = sbr.rel (%p181) target = $region16
        $region15: #{tpu_custom_call.1} parent=11 // pred_region
          %s185 = ssub.s32 512, 512
          %186 = vsyncadd [#allocation6], %s185
          %s187 = sshll.u32 [#allocation5], 4
          %s188 = int_to_ptr.vmem [resolvable:$true] %s187
          %193 = dma.hbm_to_vmem [thread:$0]  %s1, 512, %s188, [#allocation6], 128, 128, 8
        $region16: #{tpu_custom_call.1} parent=11 // pred_fallthru
          _
      $region12: #{tpu_custom_call.1} parent=5 // pred_fallthru
        _
      %p194 = scmp.lt.s32.totalorder %s21, 4
      // Predicated region
      $region17: #{tpu_custom_call.1} parent=5 // pred_check
        %p195 = pneg %p194
      $region18: #{tpu_custom_call.1} parent=5 // pred_check_branch
        %197 = sbr.rel (%p195) target = $region20
      $region19: #{tpu_custom_call.1} parent=5 // pred_region
        // Predicated region
        $region21: #{tpu_custom_call.1} parent=19 // pred_check
          %p198 = pneg %p55
        $region22: #{tpu_custom_call.1} parent=19 // pred_check_branch
          %200 = sbr.rel (%p198) target = $region24
        $region23: #{tpu_custom_call.1} parent=19 // pred_region
          %s201 = sand.u32 %s45, 1
          %s202 = scalar_lea.sflag [#allocation3], %s201
          %s203 = sand.u32 %s45, 1
          %s204 = smul.addr %s203, 8
          %s205 = scalar_lea.vmem [#allocation2], %s204
          %s207 = ssub.s32 128, 128
          %208 = vsyncadd %s202, %s207
          %s209 = smul.addr %s28, 2
          %s210 = sadd.s32 %s29, %s209
          %s211 = smul.addr %s210, 128
          %s212 = scalar_lea.hbm %s0, %s211
          %s214 = sshll.u32 %s205, 4
          %s215 = int_to_ptr.vmem [resolvable:$true] %s214
          %217 = dma.hbm_to_vmem [thread:$0]  %s212, 128, %s215, %s202
        $region24: #{tpu_custom_call.1} parent=19 // pred_fallthru
          _
      $region20: #{tpu_custom_call.1} parent=5 // pred_fallthru
        _
      %p218 = scmp.le.s32.totalorder 1, %s21
      %p219 = scmp.lt.s32.totalorder %s21, 5
      %p220 = pnand %p218, %p219
      %p221 = pneg %p220
      // Predicated region
      $region25: #{tpu_custom_call.1} parent=5 // pred_check
        _
      $region26: #{tpu_custom_call.1} parent=5 // pred_check_branch
        %223 = sbr.rel (%p220) target = $region28
      $region27: #{tpu_custom_call.1} parent=5 // pred_region
        %s224 = ssub.s32 %s21, 1
        %s225 = sand.u32 %s48, 1
        %s226 = scalar_lea.sflag [#allocation3], %s225
        %s227 = sand.u32 %s48, 1
        %s228 = smul.addr %s227, 8
        %s229 = scalar_lea.vmem [#allocation2], %s228
        // Predicated region
        $region29: #{tpu_custom_call.1} parent=27 // pred_check
          %p230 = pneg %p61
        $region30: #{tpu_custom_call.1} parent=27 // pred_check_branch
          %232 = sbr.rel (%p230) target = $region32
        $region31: #{tpu_custom_call.1} parent=27 // pred_region
          %233 = dma.done %s226, 128
        $region32: #{tpu_custom_call.1} parent=27 // pred_fallthru
          _
        // Predicated region
        $region33: #{tpu_custom_call.1} parent=27 // pred_check
          %p234 = pneg %p82
        $region34: #{tpu_custom_call.1} parent=27 // pred_check_branch
          %236 = sbr.rel (%p234) target = $region36
        $region35: #{tpu_custom_call.1} parent=27 // pred_region
          %237 = dma.done [#allocation6], 512
        $region36: #{tpu_custom_call.1} parent=27 // pred_fallthru
          _
        %s238 = sand.u32 %s48, 1
        %s239 = scalar_lea.sflag [#allocation3], %s238
        %s240 = sand.u32 %s48, 1
        %s241 = smul.addr %s240, 8
        %s242 = scalar_lea.vmem [#allocation2], %s241
        %p243 = pneg %p61
        %p244 = pneg %p58
        %p245 = pneg %p82
        %p246 = pneg %p79
        %p247 = pneg %p110
        %p248 = pneg %p107
        %s249 = sand.u32 %s97, 1
        %s250 = scalar_lea.sflag [#allocation4], %s249
        %s251 = sand.u32 %s97, 1
        %s252 = smul.addr %s251, 8
        %s253 = scalar_lea.vmem [#allocation7], %s252
        %p254 = pneg %p138
        %p255 = pneg %p135
        %s256 = sand.u32 %s26, 1
        %s257 = scalar_lea.sflag [#allocation9], %s256
        %s258 = sand.u32 %s125, 1
        %s259 = smul.addr %s258, 8
        %s260 = scalar_lea.vmem [#allocation8], %s259
        %p261 = pneg %p166
        %p262 = pneg %p163
        %s263 = sand.u32 %s26, 1
        %s264 = scalar_lea.sflag [#allocation9], %s263
        %s265 = sand.u32 %s153, 1
        %s266 = smul.addr %s265, 8
        %s267 = scalar_lea.vmem [#allocation10], %s266
        %v268 = vld [vmem:[%s229] sm:$0xff]
        %v269 = vld [vmem:[#allocation5] sm:$0xff]
        %v270 = vld [vmem:[#allocation5 + $0x8] sm:$0xff]
        %v271 = vld [vmem:[#allocation5 + $0x10] sm:$0xff]
        %v272 = vld [vmem:[#allocation5 + $0x18] sm:$0xff]
        %vm273 = vcmask 261120
        %v275 = vsel %vm273, %v268, 0
        %277 = vmatprep.subr.mxu0 0.0
        %278 = vmatpush1.msra.mxu0 %v269
        %279 = vmatprep.subr.mxu0 0.0
        %280 = vmatpush1.msra.mxu0 %v270
        %281 = vmatprep.subr.mxu0 0.0
        %282 = vmatpush1.msra.mxu0 %v271
        %283 = vmatprep.subr.mxu0 0.0
        %284 = vmatpush1.msra.mxu0 %v272
        %285 = vmatprep.subr.mxu0 0.0
        %286 = vmatpush1.msra.mxu0 0.0
        %287 = vmatprep.subr.mxu0 0.0
        %288 = vmatpush1.msra.mxu0 0.0
        %289 = vmatprep.subr.mxu0 0.0
        %290 = vmatpush1.msra.mxu0 0.0
        %291 = vmatprep.subr.mxu0 0.0
        %292 = vmatpush1.msra.mxu0 0.0
        %293 = vmatprep.subr.mxu0 0.0
        %294 = vmatpush1.msra.mxu0 0.0
        %295 = vmatprep.subr.mxu0 0.0
        %296 = vmatpush1.msra.mxu0 0.0
        %297 = vmatprep.subr.mxu0 0.0
        %298 = vmatpush1.msra.mxu0 0.0
        %299 = vmatprep.subr.mxu0 0.0
        %300 = vmatpush1.msra.mxu0 0.0
        %301 = vmatprep.subr.mxu0 0.0
        %302 = vmatpush1.msra.mxu0 0.0
        %303 = vmatprep.subr.mxu0 0.0
        %304 = vmatpush1.msra.mxu0 0.0
        %305 = vmatprep.subr.mxu0 0.0
        %306 = vmatpush1.msra.mxu0 0.0
        %307 = vmatprep.subr.mxu0 0.0
        %308 = vmatpush1.msra.mxu0 0.0
        %309 = vmatprep.subr.mxu0 0.0
        %310 = vmatpush1.msra.mxu0 0.0
        %311 = vmatprep.subr.mxu0 0.0
        %312 = vmatpush1.msra.mxu0 0.0
        %313 = vmatprep.subr.mxu0 0.0
        %314 = vmatpush1.msra.mxu0 0.0
        %315 = vmatprep.subr.mxu0 0.0
        %316 = vmatpush1.msra.mxu0 0.0
        %317 = vmatprep.subr.mxu0 0.0
        %318 = vmatpush1.msra.mxu0 0.0
        %319 = vmatprep.subr.mxu0 0.0
        %320 = vmatpush1.msra.mxu0 0.0
        %321 = vmatprep.subr.mxu0 0.0
        %322 = vmatpush1.msra.mxu0 0.0
        %323 = vmatprep.subr.mxu0 0.0
        %324 = vmatpush1.msra.mxu0 0.0
        %325 = vmatprep.subr.mxu0 0.0
        %326 = vmatpush1.msra.mxu0 0.0
        %327 = vmatprep.subr.mxu0 0.0
        %328 = vmatpush1.msra.mxu0 0.0
        %329 = vmatprep.subr.mxu0 0.0
        %330 = vmatpush1.msra.mxu0 0.0
        %331 = vmatprep.subr.mxu0 0.0
        %332 = vmatpush1.msra.mxu0 0.0
        %333 = vmatprep.subr.mxu0 0.0
        %334 = vmatpush1.msra.mxu0 0.0
        %335 = vmatprep.subr.mxu0 0.0
        %336 = vmatpush1.msra.mxu0 0.0
        %337 = vmatprep.subr.mxu0 0.0
        %338 = vmatpush1.msra.mxu0 0.0
        %339 = vmatprep.subr.mxu0 0.0
        %340 = vmatpush1.msra.mxu0 0.0
        %341 = vmatprep.mubr.f32.mxu0 0.0
        %342 = vmatmul.mubr.f32.gmra.mrb[0].mxu0 %v275
        %v343 = vpop.f32.mrb[0].mxu0
        %v344 = vadd.f32 0.0, %v343
        %v345 = vpop.f32.mrb[0].mxu0
        %346 = vdwg.mxu0
        %347 = vst.msk [vmem:[%s253] sm:$0xff] %vm273, %v344
        %349 = vrot.lane.b32.xlu0 %v344, 96
        %v350 = vpop.permute.xlu0 %349
        %352 = vst.msk [vmem:[%s260] sm:$0xff] %vm273, %v350
        %353 = vrot.lane.b32.xlu0 %v344, 64
        %v354 = vpop.permute.xlu0 %353
        %356 = vst.msk [vmem:[%s267] sm:$0xff] %vm273, %v354
        %s357 = sand.u32 %s97, 1
        %s358 = scalar_lea.sflag [#allocation4], %s357
        %s359 = sand.u32 %s97, 1
        %s360 = smul.addr %s359, 8
        %s361 = scalar_lea.vmem [#allocation7], %s360
        %s362 = sand.u32 %s26, 1
        %s363 = scalar_lea.sflag [#allocation9], %s362
        %s364 = sand.u32 %s125, 1
        %s365 = smul.addr %s364, 8
        %s366 = scalar_lea.vmem [#allocation8], %s365
        %s367 = sand.u32 %s26, 1
        %s368 = scalar_lea.sflag [#allocation9], %s367
        %s369 = sand.u32 %s153, 1
        %s370 = smul.addr %s369, 8
        %s371 = scalar_lea.vmem [#allocation10], %s370
        // Predicated region
        $region37: #{tpu_custom_call.1} parent=27 // pred_check
          %p372 = pneg %p107
        $region38: #{tpu_custom_call.1} parent=27 // pred_check_branch
          %374 = sbr.rel (%p372) target = $region40
        $region39: #{tpu_custom_call.1} parent=27 // pred_region
          %s376 = ssub.s32 128, 128
          %377 = vsyncadd %s358, %s376
          %s378 = smul.addr %s30, 2
          %s379 = sadd.s32 %s31, %s378
          %s380 = smul.addr %s379, 128
          %s381 = scalar_lea.hbm %s2, %s380
          %s383 = sshll.u32 %s361, 4
          %s384 = int_to_ptr.vmem [resolvable:$true] %s383
          %386 = dma.vmem_to_hbm [thread:$0]  %s384, 128, %s381, %s358
        $region40: #{tpu_custom_call.1} parent=27 // pred_fallthru
          _
        // Predicated region
        $region41: #{tpu_custom_call.1} parent=27 // pred_check
          %p387 = pneg %p135
        $region42: #{tpu_custom_call.1} parent=27 // pred_check_branch
          %389 = sbr.rel (%p387) target = $region44
        $region43: #{tpu_custom_call.1} parent=27 // pred_region
          %s391 = ssub.s32 128, 128
          %392 = vsyncadd %s363, %s391
          %s393 = smul.addr %s30, 2
          %s394 = sadd.s32 %s31, %s393
          %s395 = smul.addr %s394, 128
          %s396 = scalar_lea.hbm %s3, %s395
          %s398 = sshll.u32 %s366, 4
          %s399 = int_to_ptr.vmem [resolvable:$true] %s398
          %401 = dma.vmem_to_hbm [thread:$0]  %s399, 128, %s396, %s363
        $region44: #{tpu_custom_call.1} parent=27 // pred_fallthru
          _
        // Predicated region
        $region45: #{tpu_custom_call.1} parent=27 // pred_check
          %p402 = pneg %p163
        $region46: #{tpu_custom_call.1} parent=27 // pred_check_branch
          %404 = sbr.rel (%p402) target = $region48
        $region47: #{tpu_custom_call.1} parent=27 // pred_region
          %s406 = ssub.s32 128, 128
          %407 = vsyncadd %s368, %s406
          %s408 = smul.addr %s30, 2
          %s409 = sadd.s32 %s31, %s408
          %s410 = smul.addr %s409, 128
          %s411 = scalar_lea.hbm %s4, %s410
          %s413 = sshll.u32 %s371, 4
          %s414 = int_to_ptr.vmem [resolvable:$true] %s413
          %416 = dma.vmem_to_hbm [thread:$0]  %s414, 128, %s411, %s368
        $region48: #{tpu_custom_call.1} parent=27 // pred_fallthru
          _
      $region28: #{tpu_custom_call.1} parent=5 // pred_fallthru
        _
      %p417 = scmp.le.s32.totalorder 2, %s21
      // Predicated region
      $region49: #{tpu_custom_call.1} parent=5 // pred_check
        %p418 = pneg %p417
      $region50: #{tpu_custom_call.1} parent=5 // pred_check_branch
        %420 = sbr.rel (%p418) target = $region52
      $region51: #{tpu_custom_call.1} parent=5 // pred_region
        %s421 = ssub.s32 %s21, 2
        // Predicated region
        $region53: #{tpu_custom_call.1} parent=51 // pred_check
          %p422 = pneg %p113
        $region54: #{tpu_custom_call.1} parent=51 // pred_check_branch
          %424 = sbr.rel (%p422) target = $region56
        $region55: #{tpu_custom_call.1} parent=51 // pred_region
          %s425 = sand.u32 %s98, 1
          %s426 = scalar_lea.sflag [#allocation4], %s425
          %s427 = sand.u32 %s98, 1
          %s428 = smul.addr %s427, 8
          %s429 = scalar_lea.vmem [#allocation7], %s428
          %430 = dma.done %s426, 128
        $region56: #{tpu_custom_call.1} parent=51 // pred_fallthru
          _
        // Predicated region
        $region57: #{tpu_custom_call.1} parent=51 // pred_check
          %p431 = pneg %p141
        $region58: #{tpu_custom_call.1} parent=51 // pred_check_branch
          %433 = sbr.rel (%p431) target = $region60
        $region59: #{tpu_custom_call.1} parent=51 // pred_region
          %s434 = sand.u32 %s27, 1
          %s435 = scalar_lea.sflag [#allocation9], %s434
          %s436 = sand.u32 %s126, 1
          %s437 = smul.addr %s436, 8
          %s438 = scalar_lea.vmem [#allocation8], %s437
          %439 = dma.done %s435, 128
        $region60: #{tpu_custom_call.1} parent=51 // pred_fallthru
          _
        // Predicated region
        $region61: #{tpu_custom_call.1} parent=51 // pred_check
          %p440 = pneg %p169
        $region62: #{tpu_custom_call.1} parent=51 // pred_check_branch
          %442 = sbr.rel (%p440) target = $region64
        $region63: #{tpu_custom_call.1} parent=51 // pred_region
          %s443 = sand.u32 %s27, 1
          %s444 = scalar_lea.sflag [#allocation9], %s443
          %s445 = sand.u32 %s154, 1
          %s446 = smul.addr %s445, 8
          %s447 = scalar_lea.vmem [#allocation10], %s446
          %448 = dma.done %s444, 128
        $region64: #{tpu_custom_call.1} parent=51 // pred_fallthru
          _
      $region52: #{tpu_custom_call.1} parent=5 // pred_fallthru
        _
    $region6: #{tpu_custom_call.1} parent=1 // loop_footer
      %s25 = sadd.s32 1, %s21
    $region7: #{tpu_custom_call.1} parent=1 // loop_footer_branch
      %20 = sbr.rel target = $region3
    $region8: #{tpu_custom_call.1} parent=1 // loop_exit
      _
    %449 = vsyncpa [#allocation3], 1
    %s450 = scalar_lea.sflag [#allocation3], 1
    %451 = vsyncpa %s450, 1
    %452 = vsyncpa [#allocation6], 1
    %453 = vsyncpa [#allocation4], 1
    %s454 = scalar_lea.sflag [#allocation4], 1
    %455 = vsyncpa %s454, 1
    %456 = vsyncpa [#allocation9], 1
    %s457 = scalar_lea.sflag [#allocation9], 1
    %458 = vsyncpa %s457, 1

</llo_original>
